<compile_context>
chip_gen: v7x
topology: tpu7x:2x2x1
jax: 0.10.0
libtpu: 0.0.40
codegen_flags: <defaults>
</compile_context>

<pallas_src>
import jax
import jax.numpy as jnp
from jax.experimental import pallas as pl
from jax.experimental.pallas import tpu as pltpu

# ----- model hyperparameters (small, synthetic) -----
RESOLUTION = 16          # stands in for 224 (kept small)
N_CHANNELS = 3
FEAT_DIM = 32            # CLIP feature-dim stand-in
N_CLASSES = 10           # PCBM classifier output classes
BATCH = 2

CLIP_MEAN = jnp.array([0.48145466, 0.4578275, 0.40821073], dtype=jnp.float32)
CLIP_STD = jnp.array([0.26862954, 0.26130258, 0.27577711], dtype=jnp.float32)

LANE = 128
BF16_SUBLANE_PACK = 16   # bf16 packs two rows per sublane -> 16-row-aligned M tiles
TM_MAX = 256             # MXU-sized M tile on v6e/v7x (2x256^2); use 128 on v5e
TK_MAX = 4096
TK_MIN = 128


def _round_up(n, m):
    return ((n + m - 1) // m) * m


def _pad2d(x, rows, cols):
    return jnp.pad(x, ((0, rows - x.shape[0]), (0, cols - x.shape[1])))


def _vmem_capacity_bytes():
    try:
        info = pltpu.get_tpu_info()
        cap = getattr(info, "vmem_capacity_bytes", None)
        if cap:
            return int(cap)
    except Exception:
        pass
    return 64 * 1024 * 1024  # v7x physical VMEM: the most restrictive generation


def _choose_k_tile(F, Dp, Cp):
    """Largest lane-aligned K tile whose double-buffered working set fits in VMEM."""
    vmem_cap = _vmem_capacity_bytes()
    budget = int(vmem_cap * 0.6)                 # leave headroom for compiler scratch
    # fixed VMEM: double-buffered out (f32) + f32 acc scratch + resident w2/b1/b2 buffers
    fixed = (2 * TM_MAX * Cp * 4
             + TM_MAX * Dp * 4
             + 2 * (Dp * Cp * 2 + Dp * 4 + Cp * 4))
    per_tk = 4 * (TM_MAX + Dp)                   # 2 bufs * (x bf16 row + w1 bf16 row) per K elem
    tk = (budget - fixed) // per_tk
    tk = max(TK_MIN, min(TK_MAX, (tk // LANE) * LANE))
    tk = min(tk, _round_up(F, LANE))
    vmem_limit = int(vmem_cap * 3 // 4)
    return int(tk), int(vmem_limit)


def _fused_kernel(x_ref, w1_ref, b1_ref, w2_ref, b2_ref, out_ref, acc_ref):
    # Grid = (M_tiles, K_tiles); K (reduction) is the last / "arbitrary" axis.
    # x_ref:  (TM, TK)   bf16  pixels tile (Normalize folded into w1/b1)
    # w1_ref: (TK, Dp)   bf16  encoder weights tile (streams over K)
    # b1_ref: (1, Dp)    f32
    # w2_ref: (Dp, Cp)   bf16  classifier weights (padded, resident)
    # b2_ref: (1, Cp)    f32
    # out_ref:(TM, Cp)   f32   logits (padded, lane-dense)
    # acc_ref:(TM, Dp)   f32   feature accumulator scratch
    k = pl.program_id(1)

    @pl.when(k == 0)
    def _():
        acc_ref[...] = jnp.zeros_like(acc_ref)

    # encode_image stand-in: bf16 operands, f32 accumulation on the MXU.
    acc_ref[...] += jnp.dot(x_ref[...], w1_ref[...],
                            preferred_element_type=jnp.float32)

    @pl.when(k == pl.num_programs(1) - 1)
    def _():
        feat = acc_ref[...] + b1_ref[...]                 # == features.float()
        # classifier: bf16 operands + f32 accumulation (halves MXU passes vs f32xf32)
        logits = jnp.dot(feat.astype(jnp.bfloat16), w2_ref[...],
                         preferred_element_type=jnp.float32) + b2_ref[...]
        out_ref[...] = logits.astype(out_ref.dtype)


def prepare_params(w_enc, b_enc, w_cls, b_cls, image_shape):
    """One-time (per model load) Normalize fold + padding + bf16 casts of the weights.

    Hoisted out of the per-call forward path (perf review): at real CLIP sizes this
    avoids an extra full read/write of the 200+ MiB weight tensor every forward.
    """
    C, H, W = image_shape
    F = C * H * W
    D = w_enc.shape[1]
    NC = w_cls.shape[1]

    # ---- fold per-channel Normalize((x-mean)/std) into the encoder weights (f32, exact) ----
    scale_c = 1.0 / CLIP_STD                                   # (3,)
    shift_c = -CLIP_MEAN / CLIP_STD                            # (3,)
    scale_f = jnp.broadcast_to(scale_c[:, None, None], (C, H, W)).reshape(F, 1)
    shift_f = jnp.broadcast_to(shift_c[:, None, None], (C, H, W)).reshape(1, F)
    w1 = w_enc.astype(jnp.float32) * scale_f                   # (F, D)
    b1 = shift_f @ w_enc.astype(jnp.float32) + b_enc           # (1, D)

    # ---- lane-aligned padded shapes + adaptive K tile ----
    Dp = _round_up(D, LANE)            # 32 -> 128 lanes
    Cp = _round_up(NC, LANE)           # 10 -> 128 lanes (lane-dense output store)
    TK, vmem_limit = _choose_k_tile(F, Dp, Cp)
    Fp = _round_up(F, TK)              # zero-padded K (exact: padded cols x padded rows = 0)

    return dict(
        w1=_pad2d(w1, Fp, Dp).astype(jnp.bfloat16),            # fold done in f32, then cast
        b1=_pad2d(b1, 1, Dp).astype(jnp.float32),
        w2=_pad2d(w_cls.astype(jnp.float32), Dp, Cp).astype(jnp.bfloat16),
        b2=_pad2d(b_cls.astype(jnp.float32), 1, Cp),
        F=F, Fp=Fp, Dp=Dp, Cp=Cp, NC=NC, TK=TK, vmem_limit=vmem_limit,
    )


def model_wrapper_forward(images, params):
    """images: (B, 3, H, W) float32, NCHW, already at RESOLUTION."""
    B = images.shape[0]
    F, Fp, Dp, Cp = params["F"], params["Fp"], params["Dp"], params["Cp"]
    TK = params["TK"]

    # Resize/CenterCrop are identity at target resolution; Normalize folded into weights.
    x = images.reshape(B, F).astype(jnp.float32)

    # Batch padded to the bf16 sublane pack; M tile capped at the MXU-sized TM_MAX so
    # real batches give full-width MXU pushes and >=2 "parallel" M tiles (v7x 2 TCs).
    Bp16 = _round_up(B, BF16_SUBLANE_PACK)
    TM = min(Bp16, TM_MAX)
    Bp = _round_up(Bp16, TM)
    x_p = _pad2d(x, Bp, Fp).astype(jnp.bfloat16)

    grid = (Bp // TM, Fp // TK)        # (M "parallel", K "arbitrary" reduction last)

    out_p = pl.pallas_call(
        _fused_kernel,
        out_shape=jax.ShapeDtypeStruct((Bp, Cp), jnp.float32),
        grid_spec=pltpu.PrefetchScalarGridSpec(
            num_scalar_prefetch=0,
            grid=grid,
            in_specs=[
                pl.BlockSpec((TM, TK), lambda i, k: (i, k)),   # x tile
                pl.BlockSpec((TK, Dp), lambda i, k: (k, 0)),   # w1 tile (streams over K)
                pl.BlockSpec((1, Dp), lambda i, k: (0, 0)),    # b1 (resident)
                pl.BlockSpec((Dp, Cp), lambda i, k: (0, 0)),   # w2 (resident, bf16)
                pl.BlockSpec((1, Cp), lambda i, k: (0, 0)),    # b2 (resident)
            ],
            out_specs=pl.BlockSpec((TM, Cp), lambda i, k: (i, 0)),
            scratch_shapes=[pltpu.VMEM((TM, Dp), jnp.float32)],
        ),
        compiler_params=pltpu.CompilerParams(
            dimension_semantics=("parallel", "arbitrary"),
            vmem_limit_bytes=params["vmem_limit"],
        ),
    )(x_p, params["w1"], params["b1"], params["w2"], params["b2"])

    return out_p[:B, :params["NC"]]


if __name__ == "__main__":
    key = jax.random.PRNGKey(0)
    k_img, k_w1, k_b1, k_w2, k_b2 = jax.random.split(key, 5)

    F = N_CHANNELS * RESOLUTION * RESOLUTION

    # Example input: pixel values in [0, 1], already at target resolution.
    images = jax.random.uniform(
        k_img, (BATCH, N_CHANNELS, RESOLUTION, RESOLUTION), dtype=jnp.float32)

    # Deterministic synthetic parameters.
    w_enc = jax.random.normal(k_w1, (F, FEAT_DIM), dtype=jnp.float32) * 0.02
    b_enc = jax.random.normal(k_b1, (1, FEAT_DIM), dtype=jnp.float32) * 0.01
    w_cls = jax.random.normal(k_w2, (FEAT_DIM, N_CLASSES), dtype=jnp.float32) * 0.1
    b_cls = jax.random.normal(k_b2, (1, N_CLASSES), dtype=jnp.float32) * 0.01

    # One-time weight preparation (hoisted out of the forward path).
    params = prepare_params(w_enc, b_enc, w_cls, b_cls,
                            (N_CHANNELS, RESOLUTION, RESOLUTION))

    logits = model_wrapper_forward(images, params)
    jax.block_until_ready(logits)

    # --- reference 1: same folding + bf16 operand scheme (tight tolerance) ---
    scale_c = 1.0 / CLIP_STD
    shift_c = -CLIP_MEAN / CLIP_STD
    scale_f = jnp.broadcast_to(
        scale_c[:, None, None], (N_CHANNELS, RESOLUTION, RESOLUTION)).reshape(F, 1)
    shift_f = jnp.broadcast_to(
        shift_c[:, None, None], (N_CHANNELS, RESOLUTION, RESOLUTION)).reshape(1, F)
    w1_ref = (w_enc * scale_f).astype(jnp.bfloat16).astype(jnp.float32)
    b1_ref = shift_f @ w_enc + b_enc
    x_ref = images.reshape(BATCH, F).astype(jnp.bfloat16).astype(jnp.float32)
    feat_ref = jnp.dot(x_ref, w1_ref, precision=jax.lax.Precision.HIGHEST) + b1_ref
    w2_ref = w_cls.astype(jnp.bfloat16).astype(jnp.float32)
    logits_ref = jnp.dot(feat_ref.astype(jnp.bfloat16).astype(jnp.float32), w2_ref,
                         precision=jax.lax.Precision.HIGHEST) + b_cls
    assert jnp.allclose(logits, logits_ref, atol=1e-2, rtol=1e-2), \
        "mismatch vs bf16-matched reference"

    # --- reference 2: original pure-f32 module semantics (loose tolerance for bf16 cast) ---
    xn = images * scale_c[None, :, None, None] + shift_c[None, :, None, None]
    feat_f32 = jnp.dot(xn.reshape(BATCH, F), w_enc,
                       precision=jax.lax.Precision.HIGHEST) + b_enc
    logits_f32 = jnp.dot(feat_f32, w_cls,
                         precision=jax.lax.Precision.HIGHEST) + b_cls
    assert jnp.allclose(logits, logits_f32, atol=5e-2, rtol=5e-2), \
        "mismatch vs f32 reference"

    print("KERNEL_OK")
</pallas_src>

<mosaic_0001>
module attributes {stable_mosaic.version = 11 : i64} {
  func.func @_fused_kernel(%arg0: i32, %arg1: i32, %arg2: memref<16x768xbf16, #tpu.memory_space<vmem>>, %arg3: memref<768x128xbf16, #tpu.memory_space<vmem>>, %arg4: memref<1x128xf32, #tpu.memory_space<vmem>>, %arg5: memref<128x128xbf16, #tpu.memory_space<vmem>>, %arg6: memref<1x128xf32, #tpu.memory_space<vmem>>, %arg7: memref<16x128xf32, #tpu.memory_space<vmem>>, %arg8: memref<16x128xf32, #tpu.memory_space<vmem>>) attributes {dimension_semantics = [#tpu.dimension_semantics<parallel>, #tpu.dimension_semantics<arbitrary>], iteration_bounds = array<i64: 1, 1>, scalar_prefetch = 0 : i64, scratch_operands = 1 : i64, tpu.core_type = #tpu.core_type<tc>, window_params = [{transform_indices = @transform_0, window_bounds = array<i64: 16, 768>}, {transform_indices = @transform_1, window_bounds = array<i64: 768, 128>}, {pipeline_mode = #tpu.pipeline_mode<synchronous>, transform_indices = @transform_2, window_bounds = array<i64: 1, 128>}, {pipeline_mode = #tpu.pipeline_mode<synchronous>, transform_indices = @transform_3, window_bounds = array<i64: 128, 128>}, {pipeline_mode = #tpu.pipeline_mode<synchronous>, transform_indices = @transform_4, window_bounds = array<i64: 1, 128>}, {transform_indices = @transform_5, window_bounds = array<i64: 16, 128>}]} {
    %c0_i32 = arith.constant 0 : i32
    %0 = arith.cmpi eq, %arg1, %c0_i32 : i32
    %1 = arith.extui %0 : i1 to i32
    %c0_i32_0 = arith.constant 0 : i32
    %2 = arith.cmpi ne, %1, %c0_i32_0 : i32
    scf.if %2 {
      %cst_10 = arith.constant 0.000000e+00 : f32
      %12 = vector.broadcast %cst_10 : f32 to vector<16x128xf32>
      %c0_11 = arith.constant 0 : index
      %c0_12 = arith.constant 0 : index
      %13 = vector.load %arg8[%c0_11, %c0_12] : memref<16x128xf32, #tpu.memory_space<vmem>>, vector<16x128xf32>
      tpu.vector_store %arg8[%c0_11, %c0_12], %12 {strides = array<i32>} : memref<16x128xf32, #tpu.memory_space<vmem>>, vector<16x128xf32>,
    } else {
    }
    %c0 = arith.constant 0 : index
    %c0_1 = arith.constant 0 : index
    %3 = vector.load %arg8[%c0, %c0_1] : memref<16x128xf32, #tpu.memory_space<vmem>>, vector<16x128xf32>
    %c0_2 = arith.constant 0 : index
    %c0_3 = arith.constant 0 : index
    %4 = vector.load %arg2[%c0_2, %c0_3] : memref<16x768xbf16, #tpu.memory_space<vmem>>, vector<16x768xbf16>
    %c0_4 = arith.constant 0 : index
    %c0_5 = arith.constant 0 : index
    %5 = vector.load %arg3[%c0_4, %c0_5] : memref<768x128xbf16, #tpu.memory_space<vmem>>, vector<768x128xbf16>
    %cst = arith.constant dense<0.000000e+00> : vector<16x128xf32>
    %6 = tpu.matmul %4, %5, %cst {dimension_numbers = #tpu.dot_dimension_numbers<[1], [0], [0], [1], [0, 0, 1, 1], [], []>} : vector<16x768xbf16>, vector<768x128xbf16>, vector<16x128xf32> -> vector<16x128xf32>
    %7 = arith.addf %3, %6 : vector<16x128xf32>
    %c0_6 = arith.constant 0 : index
    %c0_7 = arith.constant 0 : index
    %8 = vector.load %arg8[%c0_6, %c0_7] : memref<16x128xf32, #tpu.memory_space<vmem>>, vector<16x128xf32>
    tpu.vector_store %arg8[%c0_6, %c0_7], %7 {strides = array<i32>} : memref<16x128xf32, #tpu.memory_space<vmem>>, vector<16x128xf32>,
    %c0_i32_8 = arith.constant 0 : i32
    %9 = arith.cmpi eq, %arg1, %c0_i32_8 : i32
    %10 = arith.extui %9 : i1 to i32
    %c0_i32_9 = arith.constant 0 : i32
    %11 = arith.cmpi ne, %10, %c0_i32_9 : i32
    scf.if %11 {
      %c0_10 = arith.constant 0 : index
      %c0_11 = arith.constant 0 : index
      %12 = vector.load %arg8[%c0_10, %c0_11] : memref<16x128xf32, #tpu.memory_space<vmem>>, vector<16x128xf32>
      %c0_12 = arith.constant 0 : index
      %c0_13 = arith.constant 0 : index
      %13 = vector.load %arg4[%c0_12, %c0_13] : memref<1x128xf32, #tpu.memory_space<vmem>>, vector<1x128xf32>
      %14 = vector.broadcast %13 : vector<1x128xf32> to vector<16x128xf32>
      %15 = arith.addf %12, %14 : vector<16x128xf32>
      %16 = arith.truncf %15 : vector<16x128xf32> to vector<16x128xbf16>
      %c0_14 = arith.constant 0 : index
      %c0_15 = arith.constant 0 : index
      %17 = vector.load %arg5[%c0_14, %c0_15] : memref<128x128xbf16, #tpu.memory_space<vmem>>, vector<128x128xbf16>
      %cst_16 = arith.constant dense<0.000000e+00> : vector<16x128xf32>
      %18 = tpu.matmul %16, %17, %cst_16 {dimension_numbers = #tpu.dot_dimension_numbers<[1], [0], [0], [1], [0, 0, 1, 1], [], []>} : vector<16x128xbf16>, vector<128x128xbf16>, vector<16x128xf32> -> vector<16x128xf32>
      %c0_17 = arith.constant 0 : index
      %c0_18 = arith.constant 0 : index
      %19 = vector.load %arg6[%c0_17, %c0_18] : memref<1x128xf32, #tpu.memory_space<vmem>>, vector<1x128xf32>
      %20 = vector.broadcast %19 : vector<1x128xf32> to vector<16x128xf32>
      %21 = arith.addf %18, %20 : vector<16x128xf32>
      %c0_19 = arith.constant 0 : index
      %c0_20 = arith.constant 0 : index
      %22 = vector.load %arg7[%c0_19, %c0_20] : memref<16x128xf32, #tpu.memory_space<vmem>>, vector<16x128xf32>
      tpu.vector_store %arg7[%c0_19, %c0_20], %21 {strides = array<i32>} : memref<16x128xf32, #tpu.memory_space<vmem>>, vector<16x128xf32>,
    } else {
    }
    return
  }
  func.func @transform_0(%arg0: i32, %arg1: i32) -> (i32, i32) {
    %c0_i32 = arith.constant 0 : i32
    return %arg0, %arg1 : i32, i32
  }
  func.func @transform_1(%arg0: i32, %arg1: i32) -> (i32, i32) {
    %c0_i32 = arith.constant 0 : i32
    %c0_i32_0 = arith.constant 0 : i32
    return %arg1, %c0_i32 : i32, i32
  }
  func.func @transform_2(%arg0: i32, %arg1: i32) -> (i32, i32) {
    %c0_i32 = arith.constant 0 : i32
    %c0_i32_0 = arith.constant 0 : i32
    %c0_i32_1 = arith.constant 0 : i32
    return %c0_i32, %c0_i32_0 : i32, i32
  }
  func.func @transform_3(%arg0: i32, %arg1: i32) -> (i32, i32) {
    %c0_i32 = arith.constant 0 : i32
    %c0_i32_0 = arith.constant 0 : i32
    %c0_i32_1 = arith.constant 0 : i32
    return %c0_i32, %c0_i32_0 : i32, i32
  }
  func.func @transform_4(%arg0: i32, %arg1: i32) -> (i32, i32) {
    %c0_i32 = arith.constant 0 : i32
    %c0_i32_0 = arith.constant 0 : i32
    %c0_i32_1 = arith.constant 0 : i32
    return %c0_i32, %c0_i32_0 : i32, i32
  }
  func.func @transform_5(%arg0: i32, %arg1: i32) -> (i32, i32) {
    %c0_i32 = arith.constant 0 : i32
    %c0_i32_0 = arith.constant 0 : i32
    return %arg0, %c0_i32 : i32, i32
  }
}

</mosaic_0001>

<llo_original>
// kernel: tpu_custom_call.1
$region0: #{tpu_custom_call.1}
  #allocation0 [shape = 'u32[]', space=smem, size = 0x4, offset = 0x4, fixed_abs, tag = 'smem constant byte address 0x4 - core index']
  #allocation1 [shape = 'u32[144,128]{1,0:T(1,128)}', space=vmem, size = 0x12000, scoped, tag = 'internal scratch']
  #allocation2 [shape = 'f32[16,128]{1,0:T(8,128)}', space=vmem, size = 0x2000, scoped, tag = 'scratch operand']
  %s0 = inlined_call_operand.hbm [shape: bf16[16,768], index: 0, kind: input, shape index: {}]
  %s1 = inlined_call_operand.hbm [shape: bf16[768,128], index: 1, kind: input, shape index: {}]
  %s2 = inlined_call_operand.vmem [shape: f32[1,128], index: 2, kind: input, shape index: {}]
  %s3 = inlined_call_operand.hbm [shape: bf16[128,128], index: 3, kind: input, shape index: {}]
  %s4 = inlined_call_operand.vmem [shape: f32[1,128], index: 4, kind: input, shape index: {}]
  %s5 = inlined_call_operand.hbm [shape: f32[16,128], index: 5, kind: output, shape index: {}]
  %s6 = sld [smem:[#allocation0]]
  $region50: #{tpu_custom_call.1} parent=0
    _
  %s8 = ssub.s32 1, %s6
  %s9 = scalar_select 0, %s8, %s6
  $region1: #{tpu_custom_call.1} parent=0
    #allocation3 [shape = 'u8[24576]{0}', space=vmem, size = 0x6000, scoped, tag = 'input window, operand 0, single buffered']
    #allocation4 [shape = 's32[1]{0}', space=sflag, size = 0x4, scoped, tag = 'scoped memory for tpu_custom_call.1']
    #allocation5 [shape = 's32[1]{0}', space=sflag, size = 0x4, scoped, tag = 'scoped memory for tpu_custom_call.1']
    #allocation6 [shape = 'u8[196608]{0}', space=vmem, size = 0x30000, scoped, tag = 'input window, operand 1, single buffered']
    #allocation7 [shape = 's32[1]{0}', space=sflag, size = 0x4, scoped, tag = 'scoped memory for tpu_custom_call.1']
    #allocation8 [shape = 'u8[32768]{0}', space=vmem, size = 0x8000, scoped, tag = 'input window, operand 3, single buffered']
    #allocation9 [shape = 'u8[8192]{0}', space=vmem, size = 0x2000, scoped, tag = 'output window, operand 0, single buffered']
    %10 = vsyncpa [#allocation4], 0
    %11 = vsyncpa [#allocation7], 0
    %12 = vsyncpa [#allocation5], 0
    // Predicated region
    $region2: #{tpu_custom_call.1} parent=1 // pred_check
      _
    $region3: #{tpu_custom_call.1} parent=1 // pred_check_branch
      %14 = sbr.rel (0) target = $region5
    $region4: #{tpu_custom_call.1} parent=1 // pred_region
      %s16 = ssub.s32 768, 768
      %17 = vsyncadd [#allocation4], %s16
      %s18 = sshll.u32 [#allocation3], 4
      %s19 = int_to_ptr.vmem [resolvable:$true] %s18
      %24 = dma.hbm_to_vmem [thread:$0]  %s0, 768, %s19, [#allocation4], 384, 384, 24
    $region5: #{tpu_custom_call.1} parent=1 // pred_fallthru
      _
    // Predicated region
    $region6: #{tpu_custom_call.1} parent=1 // pred_check
      _
    $region7: #{tpu_custom_call.1} parent=1 // pred_check_branch
      %26 = sbr.rel (0) target = $region9
    $region8: #{tpu_custom_call.1} parent=1 // pred_region
      %s28 = ssub.s32 6144, 6144
      %29 = vsyncadd [#allocation7], %s28
      %s30 = sshll.u32 [#allocation6], 4
      %s31 = int_to_ptr.vmem [resolvable:$true] %s30
      %36 = dma.hbm_to_vmem [thread:$0]  %s1, 6144, %s31, [#allocation7], 64, 64, 4
    $region9: #{tpu_custom_call.1} parent=1 // pred_fallthru
      _
    // Predicated region
    $region10: #{tpu_custom_call.1} parent=1 // pred_check
      _
    $region11: #{tpu_custom_call.1} parent=1 // pred_check_branch
      %38 = sbr.rel (0) target = $region13
    $region12: #{tpu_custom_call.1} parent=1 // pred_region
      _
    $region13: #{tpu_custom_call.1} parent=1 // pred_fallthru
      _
    // Predicated region
    $region14: #{tpu_custom_call.1} parent=1 // pred_check
      _
    $region15: #{tpu_custom_call.1} parent=1 // pred_check_branch
      %40 = sbr.rel (0) target = $region17
    $region16: #{tpu_custom_call.1} parent=1 // pred_region
      %s42 = ssub.s32 1024, 1024
      %43 = vsyncadd [#allocation7], %s42
      %s44 = sshll.u32 [#allocation8], 4
      %s45 = int_to_ptr.vmem [resolvable:$true] %s44
      %50 = dma.hbm_to_vmem [thread:$0]  %s3, 1024, %s45, [#allocation7], 64, 64, 4
    $region17: #{tpu_custom_call.1} parent=1 // pred_fallthru
      _
    // Predicated region
    $region18: #{tpu_custom_call.1} parent=1 // pred_check
      _
    $region19: #{tpu_custom_call.1} parent=1 // pred_check_branch
      %52 = sbr.rel (0) target = $region21
    $region20: #{tpu_custom_call.1} parent=1 // pred_region
      _
    $region21: #{tpu_custom_call.1} parent=1 // pred_fallthru
      _
    // Predicated region
    $region22: #{tpu_custom_call.1} parent=1 // pred_check
      _
    $region23: #{tpu_custom_call.1} parent=1 // pred_check_branch
      %54 = sbr.rel (0) target = $region25
    $region24: #{tpu_custom_call.1} parent=1 // pred_region
      %55 = dma.done [#allocation4], 768
    $region25: #{tpu_custom_call.1} parent=1 // pred_fallthru
      _
    // Predicated region
    $region26: #{tpu_custom_call.1} parent=1 // pred_check
      _
    $region27: #{tpu_custom_call.1} parent=1 // pred_check_branch
      %57 = sbr.rel (0) target = $region29
    $region28: #{tpu_custom_call.1} parent=1 // pred_region
      %58 = dma.done [#allocation7], 6144
    $region29: #{tpu_custom_call.1} parent=1 // pred_fallthru
      _
    // Predicated region
    $region30: #{tpu_custom_call.1} parent=1 // pred_check
      _
    $region31: #{tpu_custom_call.1} parent=1 // pred_check_branch
      %60 = sbr.rel (0) target = $region33
    $region32: #{tpu_custom_call.1} parent=1 // pred_region
      %61 = dma.done [#allocation7], 1024
    $region33: #{tpu_custom_call.1} parent=1 // pred_fallthru
      _
    %p63 = scmp.eq.s32.totalorder 0, 0
    // Predicated region
    $region34: #{tpu_custom_call.1} parent=1 // pred_check
      %p64 = pneg %p63
    $region35: #{tpu_custom_call.1} parent=1 // pred_check_branch
      %66 = sbr.rel (%p64) target = $region37
    $region36: #{tpu_custom_call.1} parent=1 // pred_region
      %67 = vst [vmem:[#allocation2] sm:$0xff] 0.0
      %68 = vst [vmem:[#allocation2 + $0x8] sm:$0xff] 0.0
    $region37: #{tpu_custom_call.1} parent=1 // pred_fallthru
      _
    %v69 = vld [vmem:[#allocation2] sm:$0xff]
    %v70 = vld [vmem:[#allocation2 + $0x8] sm:$0xff]
    %v71 = vld [vmem:[#allocation3] sm:$0xff]
    %v72 = vld [vmem:[#allocation3 + $0x8] sm:$0xff]
    %v73 = vld [vmem:[#allocation3 + $0x10] sm:$0xff]
    %v74 = vld [vmem:[#allocation3 + $0x18] sm:$0xff]
    %v75 = vld [vmem:[#allocation3 + $0x20] sm:$0xff]
    %v76 = vld [vmem:[#allocation3 + $0x28] sm:$0xff]
    %v77 = vld [vmem:[#allocation6] sm:$0xf]
    %v78 = vld [vmem:[#allocation6 + $0x4] sm:$0xf]
    %v79 = vld [vmem:[#allocation6 + $0x8] sm:$0xf]
    %v80 = vld [vmem:[#allocation6 + $0xc] sm:$0xf]
    %v81 = vld [vmem:[#allocation6 + $0x10] sm:$0xf]
    %v82 = vld [vmem:[#allocation6 + $0x14] sm:$0xf]
    %v83 = vld [vmem:[#allocation6 + $0x18] sm:$0xf]
    %v84 = vld [vmem:[#allocation6 + $0x1c] sm:$0xf]
    %v85 = vld [vmem:[#allocation6 + $0x20] sm:$0xf]
    %v86 = vld [vmem:[#allocation6 + $0x24] sm:$0xf]
    %v87 = vld [vmem:[#allocation6 + $0x28] sm:$0xf]
    %v88 = vld [vmem:[#allocation6 + $0x2c] sm:$0xf]
    %v89 = vld [vmem:[#allocation6 + $0x30] sm:$0xf]
    %v90 = vld [vmem:[#allocation6 + $0x34] sm:$0xf]
    %v91 = vld [vmem:[#allocation6 + $0x38] sm:$0xf]
    %v92 = vld [vmem:[#allocation6 + $0x3c] sm:$0xf]
    %v93 = vld [vmem:[#allocation6 + $0x40] sm:$0xf]
    %v94 = vld [vmem:[#allocation6 + $0x44] sm:$0xf]
    %v95 = vld [vmem:[#allocation6 + $0x48] sm:$0xf]
    %v96 = vld [vmem:[#allocation6 + $0x4c] sm:$0xf]
    %v97 = vld [vmem:[#allocation6 + $0x50] sm:$0xf]
    %v98 = vld [vmem:[#allocation6 + $0x54] sm:$0xf]
    %v99 = vld [vmem:[#allocation6 + $0x58] sm:$0xf]
    %v100 = vld [vmem:[#allocation6 + $0x5c] sm:$0xf]
    %v101 = vld [vmem:[#allocation6 + $0x60] sm:$0xf]
    %v102 = vld [vmem:[#allocation6 + $0x64] sm:$0xf]
    %v103 = vld [vmem:[#allocation6 + $0x68] sm:$0xf]
    %v104 = vld [vmem:[#allocation6 + $0x6c] sm:$0xf]
    %v105 = vld [vmem:[#allocation6 + $0x70] sm:$0xf]
    %v106 = vld [vmem:[#allocation6 + $0x74] sm:$0xf]
    %v107 = vld [vmem:[#allocation6 + $0x78] sm:$0xf]
    %v108 = vld [vmem:[#allocation6 + $0x7c] sm:$0xf]
    %v109 = vld [vmem:[#allocation6 + $0x80] sm:$0xf]
    %v110 = vld [vmem:[#allocation6 + $0x84] sm:$0xf]
    %v111 = vld [vmem:[#allocation6 + $0x88] sm:$0xf]
    %v112 = vld [vmem:[#allocation6 + $0x8c] sm:$0xf]
    %v113 = vld [vmem:[#allocation6 + $0x90] sm:$0xf]
    %v114 = vld [vmem:[#allocation6 + $0x94] sm:$0xf]
    %v115 = vld [vmem:[#allocation6 + $0x98] sm:$0xf]
    %v116 = vld [vmem:[#allocation6 + $0x9c] sm:$0xf]
    %v117 = vld [vmem:[#allocation6 + $0xa0] sm:$0xf]
    %v118 = vld [vmem:[#allocation6 + $0xa4] sm:$0xf]
    %v119 = vld [vmem:[#allocation6 + $0xa8] sm:$0xf]
    %v120 = vld [vmem:[#allocation6 + $0xac] sm:$0xf]
    %v121 = vld [vmem:[#allocation6 + $0xb0] sm:$0xf]
    %v122 = vld [vmem:[#allocation6 + $0xb4] sm:$0xf]
    %v123 = vld [vmem:[#allocation6 + $0xb8] sm:$0xf]
    %v124 = vld [vmem:[#allocation6 + $0xbc] sm:$0xf]
    %v125 = vld [vmem:[#allocation6 + $0xc0] sm:$0xf]
    %v126 = vld [vmem:[#allocation6 + $0xc4] sm:$0xf]
    %v127 = vld [vmem:[#allocation6 + $0xc8] sm:$0xf]
    %v128 = vld [vmem:[#allocation6 + $0xcc] sm:$0xf]
    %v129 = vld [vmem:[#allocation6 + $0xd0] sm:$0xf]
    %v130 = vld [vmem:[#allocation6 + $0xd4] sm:$0xf]
    %v131 = vld [vmem:[#allocation6 + $0xd8] sm:$0xf]
    %v132 = vld [vmem:[#allocation6 + $0xdc] sm:$0xf]
    %v133 = vld [vmem:[#allocation6 + $0xe0] sm:$0xf]
    %v134 = vld [vmem:[#allocation6 + $0xe4] sm:$0xf]
    %v135 = vld [vmem:[#allocation6 + $0xe8] sm:$0xf]
    %v136 = vld [vmem:[#allocation6 + $0xec] sm:$0xf]
    %v137 = vld [vmem:[#allocation6 + $0xf0] sm:$0xf]
    %v138 = vld [vmem:[#allocation6 + $0xf4] sm:$0xf]
    %v139 = vld [vmem:[#allocation6 + $0xf8] sm:$0xf]
    %v140 = vld [vmem:[#allocation6 + $0xfc] sm:$0xf]
    %v141 = vld [vmem:[#allocation6 + $0x100] sm:$0xf]
    %v142 = vld [vmem:[#allocation6 + $0x104] sm:$0xf]
    %v143 = vld [vmem:[#allocation6 + $0x108] sm:$0xf]
    %v144 = vld [vmem:[#allocation6 + $0x10c] sm:$0xf]
    %v145 = vld [vmem:[#allocation6 + $0x110] sm:$0xf]
    %v146 = vld [vmem:[#allocation6 + $0x114] sm:$0xf]
    %v147 = vld [vmem:[#allocation6 + $0x118] sm:$0xf]
    %v148 = vld [vmem:[#allocation6 + $0x11c] sm:$0xf]
    %v149 = vld [vmem:[#allocation6 + $0x120] sm:$0xf]
    %v150 = vld [vmem:[#allocation6 + $0x124] sm:$0xf]
    %v151 = vld [vmem:[#allocation6 + $0x128] sm:$0xf]
    %v152 = vld [vmem:[#allocation6 + $0x12c] sm:$0xf]
    %v153 = vld [vmem:[#allocation6 + $0x130] sm:$0xf]
    %v154 = vld [vmem:[#allocation6 + $0x134] sm:$0xf]
    %v155 = vld [vmem:[#allocation6 + $0x138] sm:$0xf]
    %v156 = vld [vmem:[#allocation6 + $0x13c] sm:$0xf]
    %v157 = vld [vmem:[#allocation6 + $0x140] sm:$0xf]
    %v158 = vld [vmem:[#allocation6 + $0x144] sm:$0xf]
    %v159 = vld [vmem:[#allocation6 + $0x148] sm:$0xf]
    %v160 = vld [vmem:[#allocation6 + $0x14c] sm:$0xf]
    %v161 = vld [vmem:[#allocation6 + $0x150] sm:$0xf]
    %v162 = vld [vmem:[#allocation6 + $0x154] sm:$0xf]
    %v163 = vld [vmem:[#allocation6 + $0x158] sm:$0xf]
    %v164 = vld [vmem:[#allocation6 + $0x15c] sm:$0xf]
    %v165 = vld [vmem:[#allocation6 + $0x160] sm:$0xf]
    %v166 = vld [vmem:[#allocation6 + $0x164] sm:$0xf]
    %v167 = vld [vmem:[#allocation6 + $0x168] sm:$0xf]
    %v168 = vld [vmem:[#allocation6 + $0x16c] sm:$0xf]
    %v169 = vld [vmem:[#allocation6 + $0x170] sm:$0xf]
    %v170 = vld [vmem:[#allocation6 + $0x174] sm:$0xf]
    %v171 = vld [vmem:[#allocation6 + $0x178] sm:$0xf]
    %v172 = vld [vmem:[#allocation6 + $0x17c] sm:$0xf]
    %v179 = vunpack.c.l.b16 %v71
    %v180 = vunpack.c.h.b16 %v71
    %v181 = vunpack.c.l.b16 %v72
    %v182 = vunpack.c.h.b16 %v72
    %v183 = vunpack.c.l.b16 %v73
    %v184 = vunpack.c.h.b16 %v73
    %v185 = vunpack.c.l.b16 %v74
    %v186 = vunpack.c.h.b16 %v74
    %v187 = vunpack.c.l.b16 %v75
    %v188 = vunpack.c.h.b16 %v75
    %v189 = vunpack.c.l.b16 %v76
    %v190 = vunpack.c.h.b16 %v76
    %v191 = vpack.c.b16 %v185, %v179
    %v192 = vpack.c.b16 %v186, %v180
    %v193 = vpack.c.b16 %v187, %v181
    %v194 = vpack.c.b16 %v188, %v182
    %v195 = vpack.c.b16 %v189, %v183
    %v196 = vpack.c.b16 %v190, %v184
    %v299 = vunpack.c.l.b16 %v77
    %v300 = vunpack.c.l.b16 %v78
    %v301 = vunpack.c.l.b16 %v79
    %v302 = vunpack.c.l.b16 %v80
    %v303 = vunpack.c.l.b16 %v81
    %v304 = vunpack.c.l.b16 %v82
    %v305 = vunpack.c.l.b16 %v83
    %v306 = vunpack.c.l.b16 %v84
    %v307 = vunpack.c.l.b16 %v85
    %v308 = vunpack.c.l.b16 %v86
    %v309 = vunpack.c.l.b16 %v87
    %v310 = vunpack.c.l.b16 %v88
    %v311 = vunpack.c.l.b16 %v89
    %v312 = vunpack.c.l.b16 %v90
    %v313 = vunpack.c.l.b16 %v91
    %v314 = vunpack.c.l.b16 %v92
    %v315 = vunpack.c.l.b16 %v93
    %v316 = vunpack.c.l.b16 %v94
    %v317 = vunpack.c.l.b16 %v95
    %v318 = vunpack.c.l.b16 %v96
    %v319 = vunpack.c.l.b16 %v97
    %v320 = vunpack.c.l.b16 %v98
    %v321 = vunpack.c.l.b16 %v99
    %v322 = vunpack.c.l.b16 %v100
    %v323 = vunpack.c.l.b16 %v101
    %v324 = vunpack.c.l.b16 %v102
    %v325 = vunpack.c.l.b16 %v103
    %v326 = vunpack.c.l.b16 %v104
    %v327 = vunpack.c.l.b16 %v105
    %v328 = vunpack.c.l.b16 %v106
    %v329 = vunpack.c.l.b16 %v107
    %v330 = vunpack.c.l.b16 %v108
    %v331 = vunpack.c.l.b16 %v109
    %v332 = vunpack.c.l.b16 %v110
    %v333 = vunpack.c.l.b16 %v111
    %v334 = vunpack.c.l.b16 %v112
    %v335 = vunpack.c.l.b16 %v113
    %v336 = vunpack.c.l.b16 %v114
    %v337 = vunpack.c.l.b16 %v115
    %v338 = vunpack.c.l.b16 %v116
    %v339 = vunpack.c.l.b16 %v117
    %v340 = vunpack.c.l.b16 %v118
    %v341 = vunpack.c.l.b16 %v119
    %v342 = vunpack.c.l.b16 %v120
    %v343 = vunpack.c.l.b16 %v121
    %v344 = vunpack.c.l.b16 %v122
    %v345 = vunpack.c.l.b16 %v123
    %v346 = vunpack.c.l.b16 %v124
    %v347 = vunpack.c.l.b16 %v125
    %v348 = vunpack.c.l.b16 %v126
    %v349 = vunpack.c.l.b16 %v127
    %v350 = vunpack.c.l.b16 %v128
    %v351 = vunpack.c.l.b16 %v129
    %v352 = vunpack.c.l.b16 %v130
    %v353 = vunpack.c.l.b16 %v131
    %v354 = vunpack.c.l.b16 %v132
    %v355 = vunpack.c.l.b16 %v133
    %v356 = vunpack.c.l.b16 %v134
    %v357 = vunpack.c.l.b16 %v135
    %v358 = vunpack.c.l.b16 %v136
    %v359 = vunpack.c.l.b16 %v137
    %v360 = vunpack.c.l.b16 %v138
    %v361 = vunpack.c.l.b16 %v139
    %v362 = vunpack.c.l.b16 %v140
    %v363 = vunpack.c.l.b16 %v141
    %v364 = vunpack.c.l.b16 %v142
    %v365 = vunpack.c.l.b16 %v143
    %v366 = vunpack.c.l.b16 %v144
    %v367 = vunpack.c.l.b16 %v145
    %v368 = vunpack.c.l.b16 %v146
    %v369 = vunpack.c.l.b16 %v147
    %v370 = vunpack.c.l.b16 %v148
    %v371 = vunpack.c.l.b16 %v149
    %v372 = vunpack.c.l.b16 %v150
    %v373 = vunpack.c.l.b16 %v151
    %v374 = vunpack.c.l.b16 %v152
    %v375 = vunpack.c.l.b16 %v153
    %v376 = vunpack.c.l.b16 %v154
    %v377 = vunpack.c.l.b16 %v155
    %v378 = vunpack.c.l.b16 %v156
    %v379 = vunpack.c.l.b16 %v157
    %v380 = vunpack.c.l.b16 %v158
    %v381 = vunpack.c.l.b16 %v159
    %v382 = vunpack.c.l.b16 %v160
    %v383 = vunpack.c.l.b16 %v161
    %v384 = vunpack.c.l.b16 %v162
    %v385 = vunpack.c.l.b16 %v163
    %v386 = vunpack.c.l.b16 %v164
    %v387 = vunpack.c.l.b16 %v165
    %v388 = vunpack.c.l.b16 %v166
    %v389 = vunpack.c.l.b16 %v167
    %v390 = vunpack.c.l.b16 %v168
    %v391 = vunpack.c.l.b16 %v169
    %v392 = vunpack.c.l.b16 %v170
    %v393 = vunpack.c.l.b16 %v171
    %v394 = vunpack.c.l.b16 %v172
    %v395 = vpack.c.b16 %v300, %v299
    %v396 = vpack.c.b16 %v302, %v301
    %v397 = vpack.c.b16 %v304, %v303
    %v398 = vpack.c.b16 %v306, %v305
    %v399 = vpack.c.b16 %v308, %v307
    %v400 = vpack.c.b16 %v310, %v309
    %v401 = vpack.c.b16 %v312, %v311
    %v402 = vpack.c.b16 %v314, %v313
    %v403 = vpack.c.b16 %v316, %v315
    %v404 = vpack.c.b16 %v318, %v317
    %v405 = vpack.c.b16 %v320, %v319
    %v406 = vpack.c.b16 %v322, %v321
    %v407 = vpack.c.b16 %v324, %v323
    %v408 = vpack.c.b16 %v326, %v325
    %v409 = vpack.c.b16 %v328, %v327
    %v410 = vpack.c.b16 %v330, %v329
    %v411 = vpack.c.b16 %v332, %v331
    %v412 = vpack.c.b16 %v334, %v333
    %v413 = vpack.c.b16 %v336, %v335
    %v414 = vpack.c.b16 %v338, %v337
    %v415 = vpack.c.b16 %v340, %v339
    %v416 = vpack.c.b16 %v342, %v341
    %v417 = vpack.c.b16 %v344, %v343
    %v418 = vpack.c.b16 %v346, %v345
    %v419 = vpack.c.b16 %v348, %v347
    %v420 = vpack.c.b16 %v350, %v349
    %v421 = vpack.c.b16 %v352, %v351
    %v422 = vpack.c.b16 %v354, %v353
    %v423 = vpack.c.b16 %v356, %v355
    %v424 = vpack.c.b16 %v358, %v357
    %v425 = vpack.c.b16 %v360, %v359
    %v426 = vpack.c.b16 %v362, %v361
    %v427 = vpack.c.b16 %v364, %v363
    %v428 = vpack.c.b16 %v366, %v365
    %v429 = vpack.c.b16 %v368, %v367
    %v430 = vpack.c.b16 %v370, %v369
    %v431 = vpack.c.b16 %v372, %v371
    %v432 = vpack.c.b16 %v374, %v373
    %v433 = vpack.c.b16 %v376, %v375
    %v434 = vpack.c.b16 %v378, %v377
    %v435 = vpack.c.b16 %v380, %v379
    %v436 = vpack.c.b16 %v382, %v381
    %v437 = vpack.c.b16 %v384, %v383
    %v438 = vpack.c.b16 %v386, %v385
    %v439 = vpack.c.b16 %v388, %v387
    %v440 = vpack.c.b16 %v390, %v389
    %v441 = vpack.c.b16 %v392, %v391
    %v442 = vpack.c.b16 %v394, %v393
    %491 = vmatprep.subr.bf16.mxu0 0
    %492 = vmatpush1.bf16.msra.mxu0 %v395
    %493 = vmatprep.subr.bf16.mxu0 0
    %494 = vmatpush1.bf16.msra.mxu0 %v396
    %495 = vmatprep.subr.bf16.mxu0 0
    %496 = vmatpush1.bf16.msra.mxu0 %v397
    %497 = vmatprep.subr.bf16.mxu0 0
    %498 = vmatpush1.bf16.msra.mxu0 %v398
    %499 = vmatprep.subr.bf16.mxu0 0
    %500 = vmatpush1.bf16.msra.mxu0 %v399
    %501 = vmatprep.subr.bf16.mxu0 0
    %502 = vmatpush1.bf16.msra.mxu0 %v400
    %503 = vmatprep.subr.bf16.mxu0 0
    %504 = vmatpush1.bf16.msra.mxu0 %v401
    %505 = vmatprep.subr.bf16.mxu0 0
    %506 = vmatpush1.bf16.msra.mxu0 %v402
    %507 = vmatprep.subr.bf16.mxu0 0
    %508 = vmatpush1.bf16.msra.mxu0 %v403
    %509 = vmatprep.subr.bf16.mxu0 0
    %510 = vmatpush1.bf16.msra.mxu0 %v404
    %511 = vmatprep.subr.bf16.mxu0 0
    %512 = vmatpush1.bf16.msra.mxu0 %v405
    %513 = vmatprep.subr.bf16.mxu0 0
    %514 = vmatpush1.bf16.msra.mxu0 %v406
    %515 = vmatprep.subr.bf16.mxu0 0
    %516 = vmatpush1.bf16.msra.mxu0 %v407
    %517 = vmatprep.subr.bf16.mxu0 0
    %518 = vmatpush1.bf16.msra.mxu0 %v408
    %519 = vmatprep.subr.bf16.mxu0 0
    %520 = vmatpush1.bf16.msra.mxu0 %v409
    %521 = vmatprep.subr.bf16.mxu0 0
    %522 = vmatpush1.bf16.msra.mxu0 %v410
    %523 = vmatprep.mubr.bf16.mxu0 %v192
    %524 = vmatmul.mubr.bf16.gmra.mrb[0].mxu0 %v191
    %v525 = vpop.f32.mrb[0].mxu0
    %v526 = vadd.f32 0.0, %v525
    %v527 = vpop.f32.mrb[0].mxu0
    %v528 = vpop.f32.mrb[0].mxu0
    %v529 = vadd.f32 0.0, %v528
    %v530 = vpop.f32.mrb[0].mxu0
    %531 = vdwg.mxu0
    %532 = vmatprep.subr.bf16.mxu0 0
    %533 = vmatpush1.bf16.msra.mxu0 %v411
    %534 = vmatprep.subr.bf16.mxu0 0
    %535 = vmatpush1.bf16.msra.mxu0 %v412
    %536 = vmatprep.subr.bf16.mxu0 0
    %537 = vmatpush1.bf16.msra.mxu0 %v413
    %538 = vmatprep.subr.bf16.mxu0 0
    %539 = vmatpush1.bf16.msra.mxu0 %v414
    %540 = vmatprep.subr.bf16.mxu0 0
    %541 = vmatpush1.bf16.msra.mxu0 %v415
    %542 = vmatprep.subr.bf16.mxu0 0
    %543 = vmatpush1.bf16.msra.mxu0 %v416
    %544 = vmatprep.subr.bf16.mxu0 0
    %545 = vmatpush1.bf16.msra.mxu0 %v417
    %546 = vmatprep.subr.bf16.mxu0 0
    %547 = vmatpush1.bf16.msra.mxu0 %v418
    %548 = vmatprep.subr.bf16.mxu0 0
    %549 = vmatpush1.bf16.msra.mxu0 %v419
    %550 = vmatprep.subr.bf16.mxu0 0
    %551 = vmatpush1.bf16.msra.mxu0 %v420
    %552 = vmatprep.subr.bf16.mxu0 0
    %553 = vmatpush1.bf16.msra.mxu0 %v421
    %554 = vmatprep.subr.bf16.mxu0 0
    %555 = vmatpush1.bf16.msra.mxu0 %v422
    %556 = vmatprep.subr.bf16.mxu0 0
    %557 = vmatpush1.bf16.msra.mxu0 %v423
    %558 = vmatprep.subr.bf16.mxu0 0
    %559 = vmatpush1.bf16.msra.mxu0 %v424
    %560 = vmatprep.subr.bf16.mxu0 0
    %561 = vmatpush1.bf16.msra.mxu0 %v425
    %562 = vmatprep.subr.bf16.mxu0 0
    %563 = vmatpush1.bf16.msra.mxu0 %v426
    %564 = vmatprep.mubr.bf16.mxu0 %v194
    %565 = vmatmul.mubr.bf16.gmra.mrb[0].mxu0 %v193
    %v566 = vpop.f32.mrb[0].mxu0
    %v567 = vadd.f32 %v526, %v566
    %v568 = vpop.f32.mrb[0].mxu0
    %v569 = vpop.f32.mrb[0].mxu0
    %v570 = vadd.f32 %v529, %v569
    %v571 = vpop.f32.mrb[0].mxu0
    %572 = vdwg.mxu0
    %573 = vmatprep.subr.bf16.mxu0 0
    %574 = vmatpush1.bf16.msra.mxu0 %v427
    %575 = vmatprep.subr.bf16.mxu0 0
    %576 = vmatpush1.bf16.msra.mxu0 %v428
    %577 = vmatprep.subr.bf16.mxu0 0
    %578 = vmatpush1.bf16.msra.mxu0 %v429
    %579 = vmatprep.subr.bf16.mxu0 0
    %580 = vmatpush1.bf16.msra.mxu0 %v430
    %581 = vmatprep.subr.bf16.mxu0 0
    %582 = vmatpush1.bf16.msra.mxu0 %v431
    %583 = vmatprep.subr.bf16.mxu0 0
    %584 = vmatpush1.bf16.msra.mxu0 %v432
    %585 = vmatprep.subr.bf16.mxu0 0
    %586 = vmatpush1.bf16.msra.mxu0 %v433
    %587 = vmatprep.subr.bf16.mxu0 0
    %588 = vmatpush1.bf16.msra.mxu0 %v434
    %589 = vmatprep.subr.bf16.mxu0 0
    %590 = vmatpush1.bf16.msra.mxu0 %v435
    %591 = vmatprep.subr.bf16.mxu0 0
    %592 = vmatpush1.bf16.msra.mxu0 %v436
    %593 = vmatprep.subr.bf16.mxu0 0
    %594 = vmatpush1.bf16.msra.mxu0 %v437
    %595 = vmatprep.subr.bf16.mxu0 0
    %596 = vmatpush1.bf16.msra.mxu0 %v438
    %597 = vmatprep.subr.bf16.mxu0 0
    %598 = vmatpush1.bf16.msra.mxu0 %v439
    %599 = vmatprep.subr.bf16.mxu0 0
    %600 = vmatpush1.bf16.msra.mxu0 %v440
    %601 = vmatprep.subr.bf16.mxu0 0
    %602 = vmatpush1.bf16.msra.mxu0 %v441
    %603 = vmatprep.subr.bf16.mxu0 0
    %604 = vmatpush1.bf16.msra.mxu0 %v442
    %605 = vmatprep.mubr.bf16.mxu0 %v196
    %606 = vmatmul.mubr.bf16.gmra.mrb[0].mxu0 %v195
    %v607 = vpop.f32.mrb[0].mxu0
    %v608 = vadd.f32 %v567, %v607
    %v609 = vpop.f32.mrb[0].mxu0
    %v610 = vpop.f32.mrb[0].mxu0
    %v611 = vadd.f32 %v570, %v610
    %v612 = vpop.f32.mrb[0].mxu0
    %613 = vdwg.mxu0
    %v614 = vadd.f32 %v69, %v608
    %v615 = vadd.f32 %v70, %v611
    %616 = vst [vmem:[#allocation2] sm:$0xff] %v614
    %617 = vst [vmem:[#allocation2 + $0x8] sm:$0xff] %v615
    // Predicated region
    $region38: #{tpu_custom_call.1} parent=1 // pred_check
      %p618 = pneg %p63
    $region39: #{tpu_custom_call.1} parent=1 // pred_check_branch
      %620 = sbr.rel (%p618) target = $region41
    $region40: #{tpu_custom_call.1} parent=1 // pred_region
      %v621 = vld [vmem:[#allocation2] sm:$0xff]
      %v622 = vld [vmem:[#allocation2 + $0x8] sm:$0xff]
      %v623 = vld [vmem:[%s2] sm:$0x1]
      %v625 = vlaneseq
      %v626 = vshrl.u32 %v625, 7
      %v627 = vsub.s32 0, %v626
      %v628 = vrot.slane %v623, %v627
      %v630 = vadd.f32 %v621, %v628
      %v631 = vadd.f32 %v622, %v628
      %v632 = vpack.c.bf16 %v631, %v630
      %v633 = vld [vmem:[#allocation8] sm:$0xf]
      %v634 = vld [vmem:[#allocation8 + $0x4] sm:$0xf]
      %v635 = vld [vmem:[#allocation8 + $0x8] sm:$0xf]
      %v636 = vld [vmem:[#allocation8 + $0xc] sm:$0xf]
      %v637 = vld [vmem:[#allocation8 + $0x10] sm:$0xf]
      %v638 = vld [vmem:[#allocation8 + $0x14] sm:$0xf]
      %v639 = vld [vmem:[#allocation8 + $0x18] sm:$0xf]
      %v640 = vld [vmem:[#allocation8 + $0x1c] sm:$0xf]
      %v641 = vld [vmem:[#allocation8 + $0x20] sm:$0xf]
      %v642 = vld [vmem:[#allocation8 + $0x24] sm:$0xf]
      %v643 = vld [vmem:[#allocation8 + $0x28] sm:$0xf]
      %v644 = vld [vmem:[#allocation8 + $0x2c] sm:$0xf]
      %v645 = vld [vmem:[#allocation8 + $0x30] sm:$0xf]
      %v646 = vld [vmem:[#allocation8 + $0x34] sm:$0xf]
      %v647 = vld [vmem:[#allocation8 + $0x38] sm:$0xf]
      %v648 = vld [vmem:[#allocation8 + $0x3c] sm:$0xf]
      %v649 = vld [vmem:[%s4] sm:$0x1]
      %v651 = vlaneseq
      %v652 = vshrl.u32 %v651, 7
      %v653 = vsub.s32 0, %v652
      %v654 = vrot.slane %v649, %v653
      %v672 = vunpack.c.l.b16 %v633
      %v673 = vunpack.c.l.b16 %v634
      %v674 = vunpack.c.l.b16 %v635
      %v675 = vunpack.c.l.b16 %v636
      %v676 = vunpack.c.l.b16 %v637
      %v677 = vunpack.c.l.b16 %v638
      %v678 = vunpack.c.l.b16 %v639
      %v679 = vunpack.c.l.b16 %v640
      %v680 = vunpack.c.l.b16 %v641
      %v681 = vunpack.c.l.b16 %v642
      %v682 = vunpack.c.l.b16 %v643
      %v683 = vunpack.c.l.b16 %v644
      %v684 = vunpack.c.l.b16 %v645
      %v685 = vunpack.c.l.b16 %v646
      %v686 = vunpack.c.l.b16 %v647
      %v687 = vunpack.c.l.b16 %v648
      %v688 = vpack.c.b16 %v673, %v672
      %v689 = vpack.c.b16 %v675, %v674
      %v690 = vpack.c.b16 %v677, %v676
      %v691 = vpack.c.b16 %v679, %v678
      %v692 = vpack.c.b16 %v681, %v680
      %v693 = vpack.c.b16 %v683, %v682
      %v694 = vpack.c.b16 %v685, %v684
      %v695 = vpack.c.b16 %v687, %v686
      %704 = vmatprep.subr.bf16.mxu0 0
      %705 = vmatpush1.bf16.msra.mxu0 %v688
      %706 = vmatprep.subr.bf16.mxu0 0
      %707 = vmatpush1.bf16.msra.mxu0 %v689
      %708 = vmatprep.subr.bf16.mxu0 0
      %709 = vmatpush1.bf16.msra.mxu0 %v690
      %710 = vmatprep.subr.bf16.mxu0 0
      %711 = vmatpush1.bf16.msra.mxu0 %v691
      %712 = vmatprep.subr.bf16.mxu0 0
      %713 = vmatpush1.bf16.msra.mxu0 %v692
      %714 = vmatprep.subr.bf16.mxu0 0
      %715 = vmatpush1.bf16.msra.mxu0 %v693
      %716 = vmatprep.subr.bf16.mxu0 0
      %717 = vmatpush1.bf16.msra.mxu0 %v694
      %718 = vmatprep.subr.bf16.mxu0 0
      %719 = vmatpush1.bf16.msra.mxu0 %v695
      %720 = vmatprep.subr.bf16.mxu0 0
      %721 = vmatpush1.bf16.msra.mxu0 0
      %722 = vmatprep.subr.bf16.mxu0 0
      %723 = vmatpush1.bf16.msra.mxu0 0
      %724 = vmatprep.subr.bf16.mxu0 0
      %725 = vmatpush1.bf16.msra.mxu0 0
      %726 = vmatprep.subr.bf16.mxu0 0
      %727 = vmatpush1.bf16.msra.mxu0 0
      %728 = vmatprep.subr.bf16.mxu0 0
      %729 = vmatpush1.bf16.msra.mxu0 0
      %730 = vmatprep.subr.bf16.mxu0 0
      %731 = vmatpush1.bf16.msra.mxu0 0
      %732 = vmatprep.subr.bf16.mxu0 0
      %733 = vmatpush1.bf16.msra.mxu0 0
      %734 = vmatprep.subr.bf16.mxu0 0
      %735 = vmatpush1.bf16.msra.mxu0 0
      %736 = vmatprep.mubr.bf16.mxu0 0
      %737 = vmatmul.mubr.bf16.gmra.mrb[0].mxu0 %v632
      %v738 = vpop.f32.mrb[0].mxu0
      %v739 = vadd.f32 %v654, %v738
      %v740 = vpop.f32.mrb[0].mxu0
      %v741 = vpop.f32.mrb[0].mxu0
      %v742 = vadd.f32 %v654, %v741
      %v743 = vpop.f32.mrb[0].mxu0
      %744 = vdwg.mxu0
      %745 = vst [vmem:[#allocation9] sm:$0xff] %v739
      %746 = vst [vmem:[#allocation9 + $0x8] sm:$0xff] %v742
    $region41: #{tpu_custom_call.1} parent=1 // pred_fallthru
      _
    // Predicated region
    $region42: #{tpu_custom_call.1} parent=1 // pred_check
      _
    $region43: #{tpu_custom_call.1} parent=1 // pred_check_branch
      %748 = sbr.rel (0) target = $region45
    $region44: #{tpu_custom_call.1} parent=1 // pred_region
      %s750 = ssub.s32 256, 256
      %751 = vsyncadd [#allocation5], %s750
      %s752 = sshll.u32 [#allocation9], 4
      %s753 = int_to_ptr.vmem [resolvable:$true] %s752
      %758 = dma.vmem_to_hbm [thread:$0]  %s753, 256, %s5, [#allocation5], 128, 128, 8
    $region45: #{tpu_custom_call.1} parent=1 // pred_fallthru
      _
    // Predicated region
    $region46: #{tpu_custom_call.1} parent=1 // pred_check
      _
    $region47: #{tpu_custom_call.1} parent=1 // pred_check_branch
      %760 = sbr.rel (0) target = $region49
    $region48: #{tpu_custom_call.1} parent=1 // pred_region
      %761 = dma.done [#allocation5], 256
    $region49: #{tpu_custom_call.1} parent=1 // pred_fallthru
      _
    %762 = vsyncpa [#allocation4], 1
    %763 = vsyncpa [#allocation7], 1
    %764 = vsyncpa [#allocation5], 1

</llo_original>
